<compile_context>
chip_gen: v7x
topology: tpu7x:2x2x1
jax: 0.10.0
libtpu: 0.0.40
codegen_flags: <defaults>
</compile_context>

<pallas_src>
import math

import jax
import jax.numpy as jnp
from jax.experimental import pallas as pl
from jax.experimental.pallas import tpu as pltpu


# ----------------------------- kernels ------------------------------------ #
def _linear_kernel_f32_out(x_ref, w_ref, b_ref, o_ref):
    """f32 output: o_ref is resident across k (index_map ignores k), so we
    accumulate into it directly; bias seeds the accumulator at k == 0."""
    @pl.when(pl.program_id(2) == 0)
    def _():
        o_ref[...] = jnp.broadcast_to(b_ref[...], o_ref.shape)

    o_ref[...] += jnp.dot(
        x_ref[...], w_ref[...], preferred_element_type=jnp.float32
    )


def _linear_kernel_acc(x_ref, w_ref, b_ref, o_ref, acc_ref):
    """Low-precision output: f32 VMEM accumulator, downcast at k == last."""
    @pl.when(pl.program_id(2) == 0)
    def _():
        acc_ref[...] = jnp.broadcast_to(b_ref[...], acc_ref.shape)

    acc_ref[...] += jnp.dot(
        x_ref[...], w_ref[...], preferred_element_type=jnp.float32
    )

    @pl.when(pl.program_id(2) == pl.num_programs(2) - 1)
    def _():
        o_ref[...] = acc_ref[...].astype(o_ref.dtype)


# ----------------------------- tiling helpers ------------------------------ #
def _round_up(n, m):
    return ((n + m - 1) // m) * m


def _pick_tile(dim, desired, align):
    """Prefer an `align`-multiple tile <= desired that divides dim; for small
    dims use the (aligned-up) full extent.  If no aligned divisor exists the
    aligned `desired` is returned and the caller zero-pads `dim` up to a
    multiple of it — never a giant full-extent block."""
    if dim <= desired:
        return dim if dim % align == 0 else _round_up(dim, align)
    t = max((desired // align) * align, align)
    cand = t
    while cand >= align:
        if dim % cand == 0:
            return cand
        cand -= align
    return t  # caller pads


def _halve(t, align):
    h = t // 2
    if h >= align and h % align == 0:
        return h
    return t


def _device_defaults():
    """Generation-aware tile defaults + VMEM cap (bytes)."""
    kind = ""
    try:
        kind = jax.devices()[0].device_kind.lower()
    except Exception:
        pass
    if "v7" in kind or "7x" in kind:
        # 64 MiB physical VMEM per TC, 2 TCs/chip; knee ~310 f/B.
        return dict(tm=512, tn=1024, tk=512, vmem_cap=48 << 20,
                    two_cores=True, deep_in_buffers=False, knee=310.0)
    if "v6" in kind:
        # 918 TF/s bf16, ~1.4 TB/s HBM; knee ~650 f/B; 128 MiB VMEM.
        return dict(tm=1024, tn=2048, tk=1024, vmem_cap=100 << 20,
                    two_cores=False, deep_in_buffers=True, knee=650.0)
    if "v5p" in kind:
        return dict(tm=512, tn=1024, tk=1024, vmem_cap=100 << 20,
                    two_cores=False, deep_in_buffers=False, knee=400.0)
    if "v5" in kind or "lite" in kind:
        # 197 TF/s bf16, ~0.82 TB/s HBM; knee ~240 f/B.
        return dict(tm=512, tn=512, tk=1024, vmem_cap=100 << 20,
                    two_cores=False, deep_in_buffers=False, knee=240.0)
    return dict(tm=512, tn=512, tk=512, vmem_cap=64 << 20,
                two_cores=False, deep_in_buffers=False, knee=400.0)


def _footprint(tm, tn, tk, xb, wb, ob, use_scratch, in_buffers):
    need = in_buffers * (tm * tk * xb + tk * tn * wb) + 2 * tn * 4
    need += 2 * tm * tn * ob
    if use_scratch:
        need += tm * tn * 4
    return need


# ----------------------------- weight prep --------------------------------- #
def prepare_linear2_weight(weight, compute_dtype=jnp.bfloat16):
    """One-time prep of the PyTorch-layout (N, K) weight: transpose to (K, N)
    and (optionally) cast to the compute dtype (bf16 recommended — the MXU
    runs bf16 with f32 accumulation far faster than emulated f32).  Cache the
    result across forward calls; do NOT call this per call."""
    w_t = jnp.asarray(weight).T
    if compute_dtype is not None:
        w_t = w_t.astype(compute_dtype)
    return w_t


# ----------------------------- wrapper ------------------------------------- #
def linear2(x, weight_t, bias, *, tm=None, tn=None, tk=None):
    """F.linear forward: x (M, K), weight_t (K, N) [pre-transposed, possibly
    pre-cast via prepare_linear2_weight], bias (N,) -> (M, N) in x.dtype.

    Accumulation is always f32; if weight_t is bf16 the operands are bf16
    (x is cast per call), which matches the PyTorch module up to rounding.
    """
    M, K = x.shape
    K2, N = weight_t.shape
    assert K == K2, (x.shape, weight_t.shape)
    bias = jnp.asarray(bias).reshape(1, -1)
    assert bias.shape[1] == N

    dflt = _device_defaults()
    tm = dflt["tm"] if tm is None else tm
    tn = dflt["tn"] if tn is None else tn
    tk = dflt["tk"] if tk is None else tk

    # (8, 128) layout: sublane dims multiples of 8, lane dims multiples of 128.
    tm = _pick_tile(M, tm, 8)
    tn = _pick_tile(N, tn, 128)
    tk = _pick_tile(K, tk, 128)

    # Operand / output dtypes.
    x_in = x if x.dtype == weight_t.dtype else x.astype(weight_t.dtype)
    out_dtype = x.dtype
    use_scratch = out_dtype != jnp.float32
    xb = x_in.dtype.itemsize
    wb = weight_t.dtype.itemsize
    ob = jnp.dtype(out_dtype).itemsize

    # VMEM-aware clamp (belt-and-suspenders for awkward shapes).
    cap = dflt["vmem_cap"]
    while _footprint(tm, tn, tk, xb, wb, ob, use_scratch, 2) > cap:
        nk = _halve(tk, 128)
        if nk != tk:
            tk = nk
            continue
        nn = _halve(tn, 128)
        if nn != tn:
            tn = nn
            continue
        nm = _halve(tm, 8)
        if nm != tm:
            tm = nm
            continue
        break

    # v7x megacore: keep the parallel grid-extent product EVEN so both
    # TensorCores get equal work.
    if dflt["two_cores"]:
        gi = pl.cdiv(M, tm)
        gj = pl.cdiv(N, tn)
        if (gi * gj) % 2 == 1:
            h = _halve(tn, 128)
            if h != tn and (pl.cdiv(N, h) % 2) == 0:
                tn = h
            else:
                h = _halve(tm, 8)
                if h != tm and (pl.cdiv(M, h) % 2) == 0:
                    tm = h

    # Zero-pad to tile multiples (zeros along K contribute nothing).
    Mp, Kp, Np = _round_up(M, tm), _round_up(K, tk), _round_up(N, tn)
    if Mp != M or Kp != K:
        x_in = jnp.pad(x_in, ((0, Mp - M), (0, Kp - K)))
    w_in = weight_t
    if Kp != K or Np != N:
        w_in = jnp.pad(w_in, ((0, Kp - K), (0, Np - N)))
    b2d = bias.astype(jnp.float32)
    if Np != N:
        b2d = jnp.pad(b2d, ((0, 0), (0, Np - N)))

    k_steps = Kp // tk

    # Deep input buffering only when below the roofline knee (v6e) and there
    # are enough k steps to hide DMA jitter — and it still fits the cap.
    in_buffers = 2
    if (dflt["deep_in_buffers"] and k_steps >= 3
            and (tm * tn) / float(tm + tn) < dflt["knee"]
            and _footprint(tm, tn, tk, xb, wb, ob, use_scratch, 3) <= cap):
        in_buffers = 3

    def _in_spec(shape, imap):
        if in_buffers != 2:
            return pl.BlockSpec(shape, imap, pipeline_mode=pl.Buffered(in_buffers))
        return pl.BlockSpec(shape, imap)

    kernel = _linear_kernel_acc if use_scratch else _linear_kernel_f32_out
    scratch = [pltpu.VMEM((tm, tn), jnp.float32)] if use_scratch else []

    need = _footprint(tm, tn, tk, xb, wb, ob, use_scratch, in_buffers)
    vmem_limit = int(min(max(int(1.35 * need), 32 << 20), cap))

    grid = (Mp // tm, Np // tn, k_steps)
    out = pl.pallas_call(
        kernel,
        out_shape=jax.ShapeDtypeStruct((Mp, Np), out_dtype),
        grid_spec=pltpu.PrefetchScalarGridSpec(
            num_scalar_prefetch=0,
            grid=grid,
            in_specs=[
                _in_spec((tm, tk), lambda i, j, k: (i, k)),   # x tile (M, K)
                _in_spec((tk, tn), lambda i, j, k: (k, j)),   # weight tile, (K, N) layout
                pl.BlockSpec((1, tn), lambda i, j, k: (0, j)),  # bias tile
            ],
            out_specs=pl.BlockSpec((tm, tn), lambda i, j, k: (i, j)),
            scratch_shapes=scratch,
        ),
        compiler_params=pltpu.CompilerParams(
            dimension_semantics=("parallel", "parallel", "arbitrary"),
            vmem_limit_bytes=vmem_limit,
        ),
    )(x_in, w_in, b2d)

    if Mp != M or Np != N:
        out = out[:M, :N]
    return out


# ----------------------------- param init ---------------------------------- #
def init_linear2_params(key, in_features, out_features, dtype=jnp.float32):
    """Deterministic replica of Linear2.reset_parameters():
    kaiming_uniform_(a=sqrt(5)) for weight, uniform(-1/sqrt(fan_in), ..) bias."""
    k_w, k_b = jax.random.split(key)
    a = math.sqrt(5.0)
    gain = math.sqrt(2.0 / (1.0 + a * a))
    fan_in = in_features
    w_bound = gain * math.sqrt(3.0 / fan_in)  # == 1/sqrt(fan_in)
    b_bound = 1.0 / math.sqrt(fan_in)
    weight = jax.random.uniform(
        k_w, (out_features, in_features), dtype, minval=-w_bound, maxval=w_bound
    )
    bias = jax.random.uniform(
        k_b, (out_features,), dtype, minval=-b_bound, maxval=b_bound
    )
    return weight, bias


if __name__ == "__main__":
    key = jax.random.PRNGKey(0)
    k_x, k_p, k_x3, k_p3 = jax.random.split(key, 4)

    # Small shapes consistent with F.linear: (batch, in_features) -> (batch, out_features)
    M, K, N = 256, 512, 256  # batch, in_features, out_features
    x = jax.random.normal(k_x, (M, K), jnp.float32)
    weight, bias = init_linear2_params(k_p, in_features=K, out_features=N)
    ref = x @ weight.T + bias

    # Default fast path: weight pre-transposed + pre-cast to bf16 ONCE
    # (cache this across forward calls); f32 accumulation in-kernel.
    w_bf16 = prepare_linear2_weight(weight, jnp.bfloat16)
    jax.block_until_ready(w_bf16)
    out = linear2(x, w_bf16, bias)
    jax.block_until_ready(out)
    assert out.shape == (M, N)
    assert out.dtype == x.dtype
    assert jnp.allclose(out, ref, atol=5e-2, rtol=5e-2)

    # Exact f32 path (bit-level semantics of the PyTorch module's forward).
    w_f32 = prepare_linear2_weight(weight, None)
    out_f32 = linear2(x, w_f32, bias)
    jax.block_until_ready(out_f32)
    assert jnp.allclose(out_f32, ref, atol=1e-4, rtol=1e-4)

    # Non-divisible shapes exercise the padding + output-slice path.
    M3, K3, N3 = 100, 300, 200
    x3 = jax.random.normal(k_x3, (M3, K3), jnp.float32)
    w3, b3 = init_linear2_params(k_p3, in_features=K3, out_features=N3)
    ref3 = x3 @ w3.T + b3
    out3 = linear2(x3, prepare_linear2_weight(w3, None), b3)
    jax.block_until_ready(out3)
    assert out3.shape == (M3, N3)
    assert jnp.allclose(out3, ref3, atol=1e-4, rtol=1e-4)

    print("KERNEL_OK")
</pallas_src>

<mosaic_0001>
module attributes {stable_mosaic.version = 11 : i64} {
  func.func @_linear_kernel_f32_out(%arg0: i32, %arg1: i32, %arg2: i32, %arg3: memref<256x512xbf16, #tpu.memory_space<vmem>>, %arg4: memref<512x256xbf16, #tpu.memory_space<vmem>>, %arg5: memref<1x256xf32, #tpu.memory_space<vmem>>, %arg6: memref<256x256xf32, #tpu.memory_space<vmem>>) attributes {dimension_semantics = [#tpu.dimension_semantics<parallel>, #tpu.dimension_semantics<parallel>, #tpu.dimension_semantics<arbitrary>], iteration_bounds = array<i64: 1, 1, 1>, scalar_prefetch = 0 : i64, scratch_operands = 0 : i64, tpu.core_type = #tpu.core_type<tc>, window_params = [{transform_indices = @transform_0, window_bounds = array<i64: 256, 512>}, {transform_indices = @transform_1, window_bounds = array<i64: 512, 256>}, {transform_indices = @transform_2, window_bounds = array<i64: 1, 256>}, {transform_indices = @transform_3, window_bounds = array<i64: 256, 256>}]} {
    %c0_i32 = arith.constant 0 : i32
    %0 = arith.cmpi eq, %arg2, %c0_i32 : i32
    %1 = arith.extui %0 : i1 to i32
    %c0_i32_0 = arith.constant 0 : i32
    %2 = arith.cmpi ne, %1, %c0_i32_0 : i32
    scf.if %2 {
      %c0_8 = arith.constant 0 : index
      %c0_9 = arith.constant 0 : index
      %9 = vector.load %arg5[%c0_8, %c0_9] : memref<1x256xf32, #tpu.memory_space<vmem>>, vector<1x256xf32>
      %10 = vector.shape_cast %9 : vector<1x256xf32> to vector<1x256xf32>
      %11 = vector.broadcast %10 : vector<1x256xf32> to vector<256x256xf32>
      %c0_10 = arith.constant 0 : index
      %c0_11 = arith.constant 0 : index
      %12 = vector.load %arg6[%c0_10, %c0_11] : memref<256x256xf32, #tpu.memory_space<vmem>>, vector<256x256xf32>
      tpu.vector_store %arg6[%c0_10, %c0_11], %11 {strides = array<i32>} : memref<256x256xf32, #tpu.memory_space<vmem>>, vector<256x256xf32>,
    } else {
    }
    %c0 = arith.constant 0 : index
    %c0_1 = arith.constant 0 : index
    %3 = vector.load %arg6[%c0, %c0_1] : memref<256x256xf32, #tpu.memory_space<vmem>>, vector<256x256xf32>
    %c0_2 = arith.constant 0 : index
    %c0_3 = arith.constant 0 : index
    %4 = vector.load %arg3[%c0_2, %c0_3] : memref<256x512xbf16, #tpu.memory_space<vmem>>, vector<256x512xbf16>
    %c0_4 = arith.constant 0 : index
    %c0_5 = arith.constant 0 : index
    %5 = vector.load %arg4[%c0_4, %c0_5] : memref<512x256xbf16, #tpu.memory_space<vmem>>, vector<512x256xbf16>
    %cst = arith.constant dense<0.000000e+00> : vector<256x256xf32>
    %6 = tpu.matmul %4, %5, %cst {dimension_numbers = #tpu.dot_dimension_numbers<[1], [0], [0], [1], [0, 0, 1, 1], [], []>} : vector<256x512xbf16>, vector<512x256xbf16>, vector<256x256xf32> -> vector<256x256xf32>
    %7 = arith.addf %3, %6 : vector<256x256xf32>
    %c0_6 = arith.constant 0 : index
    %c0_7 = arith.constant 0 : index
    %8 = vector.load %arg6[%c0_6, %c0_7] : memref<256x256xf32, #tpu.memory_space<vmem>>, vector<256x256xf32>
    tpu.vector_store %arg6[%c0_6, %c0_7], %7 {strides = array<i32>} : memref<256x256xf32, #tpu.memory_space<vmem>>, vector<256x256xf32>,
    return
  }
  func.func @transform_0(%arg0: i32, %arg1: i32, %arg2: i32) -> (i32, i32) {
    %c0_i32 = arith.constant 0 : i32
    return %arg0, %arg2 : i32, i32
  }
  func.func @transform_1(%arg0: i32, %arg1: i32, %arg2: i32) -> (i32, i32) {
    %c0_i32 = arith.constant 0 : i32
    return %arg2, %arg1 : i32, i32
  }
  func.func @transform_2(%arg0: i32, %arg1: i32, %arg2: i32) -> (i32, i32) {
    %c0_i32 = arith.constant 0 : i32
    %c0_i32_0 = arith.constant 0 : i32
    return %c0_i32, %arg1 : i32, i32
  }
  func.func @transform_3(%arg0: i32, %arg1: i32, %arg2: i32) -> (i32, i32) {
    %c0_i32 = arith.constant 0 : i32
    return %arg0, %arg1 : i32, i32
  }
}

</mosaic_0001>

<llo_original>
// kernel: tpu_custom_call.1
$region0: #{tpu_custom_call.1}
  #allocation0 [shape = 'u32[]', space=smem, size = 0x4, offset = 0x4, fixed_abs, tag = 'smem constant byte address 0x4 - core index']
  #allocation1 [shape = 'u32[144,128]{1,0:T(1,128)}', space=vmem, size = 0x12000, scoped, tag = 'internal scratch']
  %s0 = inlined_call_operand.hbm [shape: bf16[256,512], index: 0, kind: input, shape index: {}]
  %s1 = inlined_call_operand.hbm [shape: bf16[512,256], index: 1, kind: input, shape index: {}]
  %s2 = inlined_call_operand.vmem [shape: f32[1,256], index: 2, kind: input, shape index: {}]
  %s3 = inlined_call_operand.hbm [shape: f32[256,256], index: 3, kind: output, shape index: {}]
  %s4 = sld [smem:[#allocation0]]
  $region34: #{tpu_custom_call.1} parent=0
    _
  %s6 = ssub.s32 1, %s4
  %s7 = scalar_select 0, %s6, %s4
  $region1: #{tpu_custom_call.1} parent=0
    #allocation2 [shape = 'u8[262144]{0}', space=vmem, size = 0x40000, scoped, tag = 'input window, operand 0, single buffered']
    #allocation3 [shape = 's32[1]{0}', space=sflag, size = 0x4, scoped, tag = 'scoped memory for tpu_custom_call.1']
    #allocation4 [shape = 's32[1]{0}', space=sflag, size = 0x4, scoped, tag = 'scoped memory for tpu_custom_call.1']
    #allocation5 [shape = 'u8[262144]{0}', space=vmem, size = 0x40000, scoped, tag = 'input window, operand 1, single buffered']
    #allocation6 [shape = 's32[1]{0}', space=sflag, size = 0x4, scoped, tag = 'scoped memory for tpu_custom_call.1']
    #allocation7 [shape = 'u8[262144]{0}', space=vmem, size = 0x40000, scoped, tag = 'output window, operand 0, single buffered']
    %8 = vsyncpa [#allocation3], 0
    %9 = vsyncpa [#allocation6], 0
    %10 = vsyncpa [#allocation4], 0
    // Predicated region
    $region2: #{tpu_custom_call.1} parent=1 // pred_check
      _
    $region3: #{tpu_custom_call.1} parent=1 // pred_check_branch
      %12 = sbr.rel (0) target = $region5
    $region4: #{tpu_custom_call.1} parent=1 // pred_region
      %s14 = ssub.s32 8192, 8192
      %15 = vsyncadd [#allocation3], %s14
      %s16 = sshll.u32 [#allocation2], 4
      %s17 = int_to_ptr.vmem [resolvable:$true] %s16
      %22 = dma.hbm_to_vmem [thread:$0]  %s0, 8192, %s17, [#allocation3], 256, 256, 16
    $region5: #{tpu_custom_call.1} parent=1 // pred_fallthru
      _
    // Predicated region
    $region6: #{tpu_custom_call.1} parent=1 // pred_check
      _
    $region7: #{tpu_custom_call.1} parent=1 // pred_check_branch
      %24 = sbr.rel (0) target = $region9
    $region8: #{tpu_custom_call.1} parent=1 // pred_region
      %s26 = ssub.s32 8192, 8192
      %27 = vsyncadd [#allocation6], %s26
      %s28 = sshll.u32 [#allocation5], 4
      %s29 = int_to_ptr.vmem [resolvable:$true] %s28
      %34 = dma.hbm_to_vmem [thread:$0]  %s1, 8192, %s29, [#allocation6], 128, 128, 8
    $region9: #{tpu_custom_call.1} parent=1 // pred_fallthru
      _
    // Predicated region
    $region10: #{tpu_custom_call.1} parent=1 // pred_check
      _
    $region11: #{tpu_custom_call.1} parent=1 // pred_check_branch
      %36 = sbr.rel (0) target = $region13
    $region12: #{tpu_custom_call.1} parent=1 // pred_region
      _
    $region13: #{tpu_custom_call.1} parent=1 // pred_fallthru
      _
    // Predicated region
    $region14: #{tpu_custom_call.1} parent=1 // pred_check
      _
    $region15: #{tpu_custom_call.1} parent=1 // pred_check_branch
      %38 = sbr.rel (0) target = $region17
    $region16: #{tpu_custom_call.1} parent=1 // pred_region
      %39 = dma.done [#allocation3], 8192
    $region17: #{tpu_custom_call.1} parent=1 // pred_fallthru
      _
    // Predicated region
    $region18: #{tpu_custom_call.1} parent=1 // pred_check
      _
    $region19: #{tpu_custom_call.1} parent=1 // pred_check_branch
      %41 = sbr.rel (0) target = $region21
    $region20: #{tpu_custom_call.1} parent=1 // pred_region
      %42 = dma.done [#allocation6], 8192
    $region21: #{tpu_custom_call.1} parent=1 // pred_fallthru
      _
    %p43 = scmp.eq.s32.totalorder 0, 0
    // Predicated region
    $region22: #{tpu_custom_call.1} parent=1 // pred_check
      %p44 = pneg %p43
    $region23: #{tpu_custom_call.1} parent=1 // pred_check_branch
      %46 = sbr.rel (%p44) target = $region25
    $region24: #{tpu_custom_call.1} parent=1 // pred_region
      %v47 = vld [vmem:[%s2] sm:$0x3]
      %v49 = vlaneseq
      %v50 = vshrl.u32 %v49, 7
      %v51 = vsub.s32 0, %v50
      %v52 = vrot.slane %v47, %v51
      %v53 = vlaneseq
      %v54 = vshrl.u32 %v53, 7
      %v55 = vsub.s32 1, %v54
      %v56 = vrot.slane %v47, %v55
      %59 = vst [vmem:[#allocation7] sm:$0xff] %v52
      %60 = vst [vmem:[#allocation7 + $0x8] sm:$0xff] %v56
      %61 = vst [vmem:[#allocation7 + $0x10] sm:$0xff] %v52
      %62 = vst [vmem:[#allocation7 + $0x18] sm:$0xff] %v56
      %63 = vst [vmem:[#allocation7 + $0x20] sm:$0xff] %v52
      %64 = vst [vmem:[#allocation7 + $0x28] sm:$0xff] %v56
      %65 = vst [vmem:[#allocation7 + $0x30] sm:$0xff] %v52
      %66 = vst [vmem:[#allocation7 + $0x38] sm:$0xff] %v56
      %67 = vst [vmem:[#allocation7 + $0x40] sm:$0xff] %v52
      %68 = vst [vmem:[#allocation7 + $0x48] sm:$0xff] %v56
      %69 = vst [vmem:[#allocation7 + $0x50] sm:$0xff] %v52
      %70 = vst [vmem:[#allocation7 + $0x58] sm:$0xff] %v56
      %71 = vst [vmem:[#allocation7 + $0x60] sm:$0xff] %v52
      %72 = vst [vmem:[#allocation7 + $0x68] sm:$0xff] %v56
      %73 = vst [vmem:[#allocation7 + $0x70] sm:$0xff] %v52
      %74 = vst [vmem:[#allocation7 + $0x78] sm:$0xff] %v56
      %75 = vst [vmem:[#allocation7 + $0x80] sm:$0xff] %v52
      %76 = vst [vmem:[#allocation7 + $0x88] sm:$0xff] %v56
      %77 = vst [vmem:[#allocation7 + $0x90] sm:$0xff] %v52
      %78 = vst [vmem:[#allocation7 + $0x98] sm:$0xff] %v56
      %79 = vst [vmem:[#allocation7 + $0xa0] sm:$0xff] %v52
      %80 = vst [vmem:[#allocation7 + $0xa8] sm:$0xff] %v56
      %81 = vst [vmem:[#allocation7 + $0xb0] sm:$0xff] %v52
      %82 = vst [vmem:[#allocation7 + $0xb8] sm:$0xff] %v56
      %83 = vst [vmem:[#allocation7 + $0xc0] sm:$0xff] %v52
      %84 = vst [vmem:[#allocation7 + $0xc8] sm:$0xff] %v56
      %85 = vst [vmem:[#allocation7 + $0xd0] sm:$0xff] %v52
      %86 = vst [vmem:[#allocation7 + $0xd8] sm:$0xff] %v56
      %87 = vst [vmem:[#allocation7 + $0xe0] sm:$0xff] %v52
      %88 = vst [vmem:[#allocation7 + $0xe8] sm:$0xff] %v56
      %89 = vst [vmem:[#allocation7 + $0xf0] sm:$0xff] %v52
      %90 = vst [vmem:[#allocation7 + $0xf8] sm:$0xff] %v56
      %91 = vst [vmem:[#allocation7 + $0x100] sm:$0xff] %v52
      %92 = vst [vmem:[#allocation7 + $0x108] sm:$0xff] %v56
      %93 = vst [vmem:[#allocation7 + $0x110] sm:$0xff] %v52
      %94 = vst [vmem:[#allocation7 + $0x118] sm:$0xff] %v56
      %95 = vst [vmem:[#allocation7 + $0x120] sm:$0xff] %v52
      %96 = vst [vmem:[#allocation7 + $0x128] sm:$0xff] %v56
      %97 = vst [vmem:[#allocation7 + $0x130] sm:$0xff] %v52
      %98 = vst [vmem:[#allocation7 + $0x138] sm:$0xff] %v56
      %99 = vst [vmem:[#allocation7 + $0x140] sm:$0xff] %v52
      %100 = vst [vmem:[#allocation7 + $0x148] sm:$0xff] %v56
      %101 = vst [vmem:[#allocation7 + $0x150] sm:$0xff] %v52
      %102 = vst [vmem:[#allocation7 + $0x158] sm:$0xff] %v56
      %103 = vst [vmem:[#allocation7 + $0x160] sm:$0xff] %v52
      %104 = vst [vmem:[#allocation7 + $0x168] sm:$0xff] %v56
      %105 = vst [vmem:[#allocation7 + $0x170] sm:$0xff] %v52
      %106 = vst [vmem:[#allocation7 + $0x178] sm:$0xff] %v56
      %107 = vst [vmem:[#allocation7 + $0x180] sm:$0xff] %v52
      %108 = vst [vmem:[#allocation7 + $0x188] sm:$0xff] %v56
      %109 = vst [vmem:[#allocation7 + $0x190] sm:$0xff] %v52
      %110 = vst [vmem:[#allocation7 + $0x198] sm:$0xff] %v56
      %111 = vst [vmem:[#allocation7 + $0x1a0] sm:$0xff] %v52
      %112 = vst [vmem:[#allocation7 + $0x1a8] sm:$0xff] %v56
      %113 = vst [vmem:[#allocation7 + $0x1b0] sm:$0xff] %v52
      %114 = vst [vmem:[#allocation7 + $0x1b8] sm:$0xff] %v56
      %115 = vst [vmem:[#allocation7 + $0x1c0] sm:$0xff] %v52
      %116 = vst [vmem:[#allocation7 + $0x1c8] sm:$0xff] %v56
      %117 = vst [vmem:[#allocation7 + $0x1d0] sm:$0xff] %v52
      %118 = vst [vmem:[#allocation7 + $0x1d8] sm:$0xff] %v56
      %119 = vst [vmem:[#allocation7 + $0x1e0] sm:$0xff] %v52
      %120 = vst [vmem:[#allocation7 + $0x1e8] sm:$0xff] %v56
      %121 = vst [vmem:[#allocation7 + $0x1f0] sm:$0xff] %v52
      %122 = vst [vmem:[#allocation7 + $0x1f8] sm:$0xff] %v56
    $region25: #{tpu_custom_call.1} parent=1 // pred_fallthru
      _
    %v123 = vld [vmem:[#allocation7] sm:$0xff]
    %v124 = vld [vmem:[#allocation7 + $0x8] sm:$0xff]
    %v125 = vld [vmem:[#allocation7 + $0x10] sm:$0xff]
    %v126 = vld [vmem:[#allocation7 + $0x18] sm:$0xff]
    %v127 = vld [vmem:[#allocation7 + $0x20] sm:$0xff]
    %v128 = vld [vmem:[#allocation7 + $0x28] sm:$0xff]
    %v129 = vld [vmem:[#allocation7 + $0x30] sm:$0xff]
    %v130 = vld [vmem:[#allocation7 + $0x38] sm:$0xff]
    %v131 = vld [vmem:[#allocation7 + $0x40] sm:$0xff]
    %v132 = vld [vmem:[#allocation7 + $0x48] sm:$0xff]
    %v133 = vld [vmem:[#allocation7 + $0x50] sm:$0xff]
    %v134 = vld [vmem:[#allocation7 + $0x58] sm:$0xff]
    %v135 = vld [vmem:[#allocation7 + $0x60] sm:$0xff]
    %v136 = vld [vmem:[#allocation7 + $0x68] sm:$0xff]
    %v137 = vld [vmem:[#allocation7 + $0x70] sm:$0xff]
    %v138 = vld [vmem:[#allocation7 + $0x78] sm:$0xff]
    %v139 = vld [vmem:[#allocation7 + $0x80] sm:$0xff]
    %v140 = vld [vmem:[#allocation7 + $0x88] sm:$0xff]
    %v141 = vld [vmem:[#allocation7 + $0x90] sm:$0xff]
    %v142 = vld [vmem:[#allocation7 + $0x98] sm:$0xff]
    %v143 = vld [vmem:[#allocation7 + $0xa0] sm:$0xff]
    %v144 = vld [vmem:[#allocation7 + $0xa8] sm:$0xff]
    %v145 = vld [vmem:[#allocation7 + $0xb0] sm:$0xff]
    %v146 = vld [vmem:[#allocation7 + $0xb8] sm:$0xff]
    %v147 = vld [vmem:[#allocation7 + $0xc0] sm:$0xff]
    %v148 = vld [vmem:[#allocation7 + $0xc8] sm:$0xff]
    %v149 = vld [vmem:[#allocation7 + $0xd0] sm:$0xff]
    %v150 = vld [vmem:[#allocation7 + $0xd8] sm:$0xff]
    %v151 = vld [vmem:[#allocation7 + $0xe0] sm:$0xff]
    %v152 = vld [vmem:[#allocation7 + $0xe8] sm:$0xff]
    %v153 = vld [vmem:[#allocation7 + $0xf0] sm:$0xff]
    %v154 = vld [vmem:[#allocation7 + $0xf8] sm:$0xff]
    %v155 = vld [vmem:[#allocation7 + $0x100] sm:$0xff]
    %v156 = vld [vmem:[#allocation7 + $0x108] sm:$0xff]
    %v157 = vld [vmem:[#allocation7 + $0x110] sm:$0xff]
    %v158 = vld [vmem:[#allocation7 + $0x118] sm:$0xff]
    %v159 = vld [vmem:[#allocation7 + $0x120] sm:$0xff]
    %v160 = vld [vmem:[#allocation7 + $0x128] sm:$0xff]
    %v161 = vld [vmem:[#allocation7 + $0x130] sm:$0xff]
    %v162 = vld [vmem:[#allocation7 + $0x138] sm:$0xff]
    %v163 = vld [vmem:[#allocation7 + $0x140] sm:$0xff]
    %v164 = vld [vmem:[#allocation7 + $0x148] sm:$0xff]
    %v165 = vld [vmem:[#allocation7 + $0x150] sm:$0xff]
    %v166 = vld [vmem:[#allocation7 + $0x158] sm:$0xff]
    %v167 = vld [vmem:[#allocation7 + $0x160] sm:$0xff]
    %v168 = vld [vmem:[#allocation7 + $0x168] sm:$0xff]
    %v169 = vld [vmem:[#allocation7 + $0x170] sm:$0xff]
    %v170 = vld [vmem:[#allocation7 + $0x178] sm:$0xff]
    %v171 = vld [vmem:[#allocation7 + $0x180] sm:$0xff]
    %v172 = vld [vmem:[#allocation7 + $0x188] sm:$0xff]
    %v173 = vld [vmem:[#allocation7 + $0x190] sm:$0xff]
    %v174 = vld [vmem:[#allocation7 + $0x198] sm:$0xff]
    %v175 = vld [vmem:[#allocation7 + $0x1a0] sm:$0xff]
    %v176 = vld [vmem:[#allocation7 + $0x1a8] sm:$0xff]
    %v177 = vld [vmem:[#allocation7 + $0x1b0] sm:$0xff]
    %v178 = vld [vmem:[#allocation7 + $0x1b8] sm:$0xff]
    %v179 = vld [vmem:[#allocation7 + $0x1c0] sm:$0xff]
    %v180 = vld [vmem:[#allocation7 + $0x1c8] sm:$0xff]
    %v181 = vld [vmem:[#allocation7 + $0x1d0] sm:$0xff]
    %v182 = vld [vmem:[#allocation7 + $0x1d8] sm:$0xff]
    %v183 = vld [vmem:[#allocation7 + $0x1e0] sm:$0xff]
    %v184 = vld [vmem:[#allocation7 + $0x1e8] sm:$0xff]
    %v185 = vld [vmem:[#allocation7 + $0x1f0] sm:$0xff]
    %v186 = vld [vmem:[#allocation7 + $0x1f8] sm:$0xff]
    %v187 = vld [vmem:[#allocation2] sm:$0xff]
    %v188 = vld [vmem:[#allocation2 + $0x8] sm:$0xff]
    %v189 = vld [vmem:[#allocation2 + $0x10] sm:$0xff]
    %v190 = vld [vmem:[#allocation2 + $0x18] sm:$0xff]
    %v191 = vld [vmem:[#allocation2 + $0x20] sm:$0xff]
    %v192 = vld [vmem:[#allocation2 + $0x28] sm:$0xff]
    %v193 = vld [vmem:[#allocation2 + $0x30] sm:$0xff]
    %v194 = vld [vmem:[#allocation2 + $0x38] sm:$0xff]
    %v195 = vld [vmem:[#allocation2 + $0x40] sm:$0xff]
    %v196 = vld [vmem:[#allocation2 + $0x48] sm:$0xff]
    %v197 = vld [vmem:[#allocation2 + $0x50] sm:$0xff]
    %v198 = vld [vmem:[#allocation2 + $0x58] sm:$0xff]
    %v199 = vld [vmem:[#allocation2 + $0x60] sm:$0xff]
    %v200 = vld [vmem:[#allocation2 + $0x68] sm:$0xff]
    %v201 = vld [vmem:[#allocation2 + $0x70] sm:$0xff]
    %v202 = vld [vmem:[#allocation2 + $0x78] sm:$0xff]
    %v203 = vld [vmem:[#allocation2 + $0x80] sm:$0xff]
    %v204 = vld [vmem:[#allocation2 + $0x88] sm:$0xff]
    %v205 = vld [vmem:[#allocation2 + $0x90] sm:$0xff]
    %v206 = vld [vmem:[#allocation2 + $0x98] sm:$0xff]
    %v207 = vld [vmem:[#allocation2 + $0xa0] sm:$0xff]
    %v208 = vld [vmem:[#allocation2 + $0xa8] sm:$0xff]
    %v209 = vld [vmem:[#allocation2 + $0xb0] sm:$0xff]
    %v210 = vld [vmem:[#allocation2 + $0xb8] sm:$0xff]
    %v211 = vld [vmem:[#allocation2 + $0xc0] sm:$0xff]
    %v212 = vld [vmem:[#allocation2 + $0xc8] sm:$0xff]
    %v213 = vld [vmem:[#allocation2 + $0xd0] sm:$0xff]
    %v214 = vld [vmem:[#allocation2 + $0xd8] sm:$0xff]
    %v215 = vld [vmem:[#allocation2 + $0xe0] sm:$0xff]
    %v216 = vld [vmem:[#allocation2 + $0xe8] sm:$0xff]
    %v217 = vld [vmem:[#allocation2 + $0xf0] sm:$0xff]
    %v218 = vld [vmem:[#allocation2 + $0xf8] sm:$0xff]
    %v219 = vld [vmem:[#allocation2 + $0x100] sm:$0xff]
    %v220 = vld [vmem:[#allocation2 + $0x108] sm:$0xff]
    %v221 = vld [vmem:[#allocation2 + $0x110] sm:$0xff]
    %v222 = vld [vmem:[#allocation2 + $0x118] sm:$0xff]
    %v223 = vld [vmem:[#allocation2 + $0x120] sm:$0xff]
    %v224 = vld [vmem:[#allocation2 + $0x128] sm:$0xff]
    %v225 = vld [vmem:[#allocation2 + $0x130] sm:$0xff]
    %v226 = vld [vmem:[#allocation2 + $0x138] sm:$0xff]
    %v227 = vld [vmem:[#allocation2 + $0x140] sm:$0xff]
    %v228 = vld [vmem:[#allocation2 + $0x148] sm:$0xff]
    %v229 = vld [vmem:[#allocation2 + $0x150] sm:$0xff]
    %v230 = vld [vmem:[#allocation2 + $0x158] sm:$0xff]
    %v231 = vld [vmem:[#allocation2 + $0x160] sm:$0xff]
    %v232 = vld [vmem:[#allocation2 + $0x168] sm:$0xff]
    %v233 = vld [vmem:[#allocation2 + $0x170] sm:$0xff]
    %v234 = vld [vmem:[#allocation2 + $0x178] sm:$0xff]
    %v235 = vld [vmem:[#allocation2 + $0x180] sm:$0xff]
    %v236 = vld [vmem:[#allocation2 + $0x188] sm:$0xff]
    %v237 = vld [vmem:[#allocation2 + $0x190] sm:$0xff]
    %v238 = vld [vmem:[#allocation2 + $0x198] sm:$0xff]
    %v239 = vld [vmem:[#allocation2 + $0x1a0] sm:$0xff]
    %v240 = vld [vmem:[#allocation2 + $0x1a8] sm:$0xff]
    %v241 = vld [vmem:[#allocation2 + $0x1b0] sm:$0xff]
    %v242 = vld [vmem:[#allocation2 + $0x1b8] sm:$0xff]
    %v243 = vld [vmem:[#allocation2 + $0x1c0] sm:$0xff]
    %v244 = vld [vmem:[#allocation2 + $0x1c8] sm:$0xff]
    %v245 = vld [vmem:[#allocation2 + $0x1d0] sm:$0xff]
    %v246 = vld [vmem:[#allocation2 + $0x1d8] sm:$0xff]
    %v247 = vld [vmem:[#allocation2 + $0x1e0] sm:$0xff]
    %v248 = vld [vmem:[#allocation2 + $0x1e8] sm:$0xff]
    %v249 = vld [vmem:[#allocation2 + $0x1f0] sm:$0xff]
    %v250 = vld [vmem:[#allocation2 + $0x1f8] sm:$0xff]
    %v251 = vld [vmem:[#allocation5] sm:$0xff]
    %v252 = vld [vmem:[#allocation5 + $0x8] sm:$0xff]
    %v253 = vld [vmem:[#allocation5 + $0x10] sm:$0xff]
    %v254 = vld [vmem:[#allocation5 + $0x18] sm:$0xff]
    %v255 = vld [vmem:[#allocation5 + $0x20] sm:$0xff]
    %v256 = vld [vmem:[#allocation5 + $0x28] sm:$0xff]
    %v257 = vld [vmem:[#allocation5 + $0x30] sm:$0xff]
    %v258 = vld [vmem:[#allocation5 + $0x38] sm:$0xff]
    %v259 = vld [vmem:[#allocation5 + $0x40] sm:$0xff]
    %v260 = vld [vmem:[#allocation5 + $0x48] sm:$0xff]
    %v261 = vld [vmem:[#allocation5 + $0x50] sm:$0xff]
    %v262 = vld [vmem:[#allocation5 + $0x58] sm:$0xff]
    %v263 = vld [vmem:[#allocation5 + $0x60] sm:$0xff]
    %v264 = vld [vmem:[#allocation5 + $0x68] sm:$0xff]
    %v265 = vld [vmem:[#allocation5 + $0x70] sm:$0xff]
    %v266 = vld [vmem:[#allocation5 + $0x78] sm:$0xff]
    %v267 = vld [vmem:[#allocation5 + $0x80] sm:$0xff]
    %v268 = vld [vmem:[#allocation5 + $0x88] sm:$0xff]
    %v269 = vld [vmem:[#allocation5 + $0x90] sm:$0xff]
    %v270 = vld [vmem:[#allocation5 + $0x98] sm:$0xff]
    %v271 = vld [vmem:[#allocation5 + $0xa0] sm:$0xff]
    %v272 = vld [vmem:[#allocation5 + $0xa8] sm:$0xff]
    %v273 = vld [vmem:[#allocation5 + $0xb0] sm:$0xff]
    %v274 = vld [vmem:[#allocation5 + $0xb8] sm:$0xff]
    %v275 = vld [vmem:[#allocation5 + $0xc0] sm:$0xff]
    %v276 = vld [vmem:[#allocation5 + $0xc8] sm:$0xff]
    %v277 = vld [vmem:[#allocation5 + $0xd0] sm:$0xff]
    %v278 = vld [vmem:[#allocation5 + $0xd8] sm:$0xff]
    %v279 = vld [vmem:[#allocation5 + $0xe0] sm:$0xff]
    %v280 = vld [vmem:[#allocation5 + $0xe8] sm:$0xff]
    %v281 = vld [vmem:[#allocation5 + $0xf0] sm:$0xff]
    %v282 = vld [vmem:[#allocation5 + $0xf8] sm:$0xff]
    %v283 = vld [vmem:[#allocation5 + $0x100] sm:$0xff]
    %v284 = vld [vmem:[#allocation5 + $0x108] sm:$0xff]
    %v285 = vld [vmem:[#allocation5 + $0x110] sm:$0xff]
    %v286 = vld [vmem:[#allocation5 + $0x118] sm:$0xff]
    %v287 = vld [vmem:[#allocation5 + $0x120] sm:$0xff]
    %v288 = vld [vmem:[#allocation5 + $0x128] sm:$0xff]
    %v289 = vld [vmem:[#allocation5 + $0x130] sm:$0xff]
    %v290 = vld [vmem:[#allocation5 + $0x138] sm:$0xff]
    %v291 = vld [vmem:[#allocation5 + $0x140] sm:$0xff]
    %v292 = vld [vmem:[#allocation5 + $0x148] sm:$0xff]
    %v293 = vld [vmem:[#allocation5 + $0x150] sm:$0xff]
    %v294 = vld [vmem:[#allocation5 + $0x158] sm:$0xff]
    %v295 = vld [vmem:[#allocation5 + $0x160] sm:$0xff]
    %v296 = vld [vmem:[#allocation5 + $0x168] sm:$0xff]
    %v297 = vld [vmem:[#allocation5 + $0x170] sm:$0xff]
    %v298 = vld [vmem:[#allocation5 + $0x178] sm:$0xff]
    %v299 = vld [vmem:[#allocation5 + $0x180] sm:$0xff]
    %v300 = vld [vmem:[#allocation5 + $0x188] sm:$0xff]
    %v301 = vld [vmem:[#allocation5 + $0x190] sm:$0xff]
    %v302 = vld [vmem:[#allocation5 + $0x198] sm:$0xff]
    %v303 = vld [vmem:[#allocation5 + $0x1a0] sm:$0xff]
    %v304 = vld [vmem:[#allocation5 + $0x1a8] sm:$0xff]
    %v305 = vld [vmem:[#allocation5 + $0x1b0] sm:$0xff]
    %v306 = vld [vmem:[#allocation5 + $0x1b8] sm:$0xff]
    %v307 = vld [vmem:[#allocation5 + $0x1c0] sm:$0xff]
    %v308 = vld [vmem:[#allocation5 + $0x1c8] sm:$0xff]
    %v309 = vld [vmem:[#allocation5 + $0x1d0] sm:$0xff]
    %v310 = vld [vmem:[#allocation5 + $0x1d8] sm:$0xff]
    %v311 = vld [vmem:[#allocation5 + $0x1e0] sm:$0xff]
    %v312 = vld [vmem:[#allocation5 + $0x1e8] sm:$0xff]
    %v313 = vld [vmem:[#allocation5 + $0x1f0] sm:$0xff]
    %v314 = vld [vmem:[#allocation5 + $0x1f8] sm:$0xff]
    %v379 = vunpack.c.l.b16 %v187
    %v380 = vunpack.c.h.b16 %v187
    %v381 = vunpack.c.l.b16 %v188
    %v382 = vunpack.c.h.b16 %v188
    %v383 = vunpack.c.l.b16 %v189
    %v384 = vunpack.c.h.b16 %v189
    %v385 = vunpack.c.l.b16 %v190
    %v386 = vunpack.c.h.b16 %v190
    %v387 = vunpack.c.l.b16 %v191
    %v388 = vunpack.c.h.b16 %v191
    %v389 = vunpack.c.l.b16 %v192
    %v390 = vunpack.c.h.b16 %v192
    %v391 = vunpack.c.l.b16 %v193
    %v392 = vunpack.c.h.b16 %v193
    %v393 = vunpack.c.l.b16 %v194
    %v394 = vunpack.c.h.b16 %v194
    %v395 = vunpack.c.l.b16 %v195
    %v396 = vunpack.c.h.b16 %v195
    %v397 = vunpack.c.l.b16 %v196
    %v398 = vunpack.c.h.b16 %v196
    %v399 = vunpack.c.l.b16 %v197
    %v400 = vunpack.c.h.b16 %v197
    %v401 = vunpack.c.l.b16 %v198
    %v402 = vunpack.c.h.b16 %v198
    %v403 = vunpack.c.l.b16 %v199
    %v404 = vunpack.c.h.b16 %v199
    %v405 = vunpack.c.l.b16 %v200
    %v406 = vunpack.c.h.b16 %v200
    %v407 = vunpack.c.l.b16 %v201
    %v408 = vunpack.c.h.b16 %v201
    %v409 = vunpack.c.l.b16 %v202
    %v410 = vunpack.c.h.b16 %v202
    %v411 = vunpack.c.l.b16 %v203
    %v412 = vunpack.c.h.b16 %v203
    %v413 = vunpack.c.l.b16 %v204
    %v414 = vunpack.c.h.b16 %v204
    %v415 = vunpack.c.l.b16 %v205
    %v416 = vunpack.c.h.b16 %v205
    %v417 = vunpack.c.l.b16 %v206
    %v418 = vunpack.c.h.b16 %v206
    %v419 = vunpack.c.l.b16 %v207
    %v420 = vunpack.c.h.b16 %v207
    %v421 = vunpack.c.l.b16 %v208
    %v422 = vunpack.c.h.b16 %v208
    %v423 = vunpack.c.l.b16 %v209
    %v424 = vunpack.c.h.b16 %v209
    %v425 = vunpack.c.l.b16 %v210
    %v426 = vunpack.c.h.b16 %v210
    %v427 = vunpack.c.l.b16 %v211
    %v428 = vunpack.c.h.b16 %v211
    %v429 = vunpack.c.l.b16 %v212
    %v430 = vunpack.c.h.b16 %v212
    %v431 = vunpack.c.l.b16 %v213
    %v432 = vunpack.c.h.b16 %v213
    %v433 = vunpack.c.l.b16 %v214
    %v434 = vunpack.c.h.b16 %v214
    %v435 = vunpack.c.l.b16 %v215
    %v436 = vunpack.c.h.b16 %v215
    %v437 = vunpack.c.l.b16 %v216
    %v438 = vunpack.c.h.b16 %v216
    %v439 = vunpack.c.l.b16 %v217
    %v440 = vunpack.c.h.b16 %v217
    %v441 = vunpack.c.l.b16 %v218
    %v442 = vunpack.c.h.b16 %v218
    %v443 = vunpack.c.l.b16 %v219
    %v444 = vunpack.c.h.b16 %v219
    %v445 = vunpack.c.l.b16 %v220
    %v446 = vunpack.c.h.b16 %v220
    %v447 = vunpack.c.l.b16 %v221
    %v448 = vunpack.c.h.b16 %v221
    %v449 = vunpack.c.l.b16 %v222
    %v450 = vunpack.c.h.b16 %v222
    %v451 = vunpack.c.l.b16 %v223
    %v452 = vunpack.c.h.b16 %v223
    %v453 = vunpack.c.l.b16 %v224
    %v454 = vunpack.c.h.b16 %v224
    %v455 = vunpack.c.l.b16 %v225
    %v456 = vunpack.c.h.b16 %v225
    %v457 = vunpack.c.l.b16 %v226
    %v458 = vunpack.c.h.b16 %v226
    %v459 = vunpack.c.l.b16 %v227
    %v460 = vunpack.c.h.b16 %v227
    %v461 = vunpack.c.l.b16 %v228
    %v462 = vunpack.c.h.b16 %v228
    %v463 = vunpack.c.l.b16 %v229
    %v464 = vunpack.c.h.b16 %v229
    %v465 = vunpack.c.l.b16 %v230
    %v466 = vunpack.c.h.b16 %v230
    %v467 = vunpack.c.l.b16 %v231
    %v468 = vunpack.c.h.b16 %v231
    %v469 = vunpack.c.l.b16 %v232
    %v470 = vunpack.c.h.b16 %v232
    %v471 = vunpack.c.l.b16 %v233
    %v472 = vunpack.c.h.b16 %v233
    %v473 = vunpack.c.l.b16 %v234
    %v474 = vunpack.c.h.b16 %v234
    %v475 = vunpack.c.l.b16 %v235
    %v476 = vunpack.c.h.b16 %v235
    %v477 = vunpack.c.l.b16 %v236
    %v478 = vunpack.c.h.b16 %v236
    %v479 = vunpack.c.l.b16 %v237
    %v480 = vunpack.c.h.b16 %v237
    %v481 = vunpack.c.l.b16 %v238
    %v482 = vunpack.c.h.b16 %v238
    %v483 = vunpack.c.l.b16 %v239
    %v484 = vunpack.c.h.b16 %v239
    %v485 = vunpack.c.l.b16 %v240
    %v486 = vunpack.c.h.b16 %v240
    %v487 = vunpack.c.l.b16 %v241
    %v488 = vunpack.c.h.b16 %v241
    %v489 = vunpack.c.l.b16 %v242
    %v490 = vunpack.c.h.b16 %v242
    %v491 = vunpack.c.l.b16 %v243
    %v492 = vunpack.c.h.b16 %v243
    %v493 = vunpack.c.l.b16 %v244
    %v494 = vunpack.c.h.b16 %v244
    %v495 = vunpack.c.l.b16 %v245
    %v496 = vunpack.c.h.b16 %v245
    %v497 = vunpack.c.l.b16 %v246
    %v498 = vunpack.c.h.b16 %v246
    %v499 = vunpack.c.l.b16 %v247
    %v500 = vunpack.c.h.b16 %v247
    %v501 = vunpack.c.l.b16 %v248
    %v502 = vunpack.c.h.b16 %v248
    %v503 = vunpack.c.l.b16 %v249
    %v504 = vunpack.c.h.b16 %v249
    %v505 = vunpack.c.l.b16 %v250
    %v506 = vunpack.c.h.b16 %v250
    %v507 = vpack.c.b16 %v383, %v379
    %v508 = vpack.c.b16 %v384, %v380
    %v509 = vpack.c.b16 %v385, %v381
    %v510 = vpack.c.b16 %v386, %v382
    %v511 = vpack.c.b16 %v391, %v387
    %v512 = vpack.c.b16 %v392, %v388
    %v513 = vpack.c.b16 %v393, %v389
    %v514 = vpack.c.b16 %v394, %v390
    %v515 = vpack.c.b16 %v399, %v395
    %v516 = vpack.c.b16 %v400, %v396
    %v517 = vpack.c.b16 %v401, %v397
    %v518 = vpack.c.b16 %v402, %v398
    %v519 = vpack.c.b16 %v407, %v403
    %v520 = vpack.c.b16 %v408, %v404
    %v521 = vpack.c.b16 %v409, %v405
    %v522 = vpack.c.b16 %v410, %v406
    %v523 = vpack.c.b16 %v415, %v411
    %v524 = vpack.c.b16 %v416, %v412
    %v525 = vpack.c.b16 %v417, %v413
    %v526 = vpack.c.b16 %v418, %v414
    %v527 = vpack.c.b16 %v423, %v419
    %v528 = vpack.c.b16 %v424, %v420
    %v529 = vpack.c.b16 %v425, %v421
    %v530 = vpack.c.b16 %v426, %v422
    %v531 = vpack.c.b16 %v431, %v427
    %v532 = vpack.c.b16 %v432, %v428
    %v533 = vpack.c.b16 %v433, %v429
    %v534 = vpack.c.b16 %v434, %v430
    %v535 = vpack.c.b16 %v439, %v435
    %v536 = vpack.c.b16 %v440, %v436
    %v537 = vpack.c.b16 %v441, %v437
    %v538 = vpack.c.b16 %v442, %v438
    %v539 = vpack.c.b16 %v447, %v443
    %v540 = vpack.c.b16 %v448, %v444
    %v541 = vpack.c.b16 %v449, %v445
    %v542 = vpack.c.b16 %v450, %v446
    %v543 = vpack.c.b16 %v455, %v451
    %v544 = vpack.c.b16 %v456, %v452
    %v545 = vpack.c.b16 %v457, %v453
    %v546 = vpack.c.b16 %v458, %v454
    %v547 = vpack.c.b16 %v463, %v459
    %v548 = vpack.c.b16 %v464, %v460
    %v549 = vpack.c.b16 %v465, %v461
    %v550 = vpack.c.b16 %v466, %v462
    %v551 = vpack.c.b16 %v471, %v467
    %v552 = vpack.c.b16 %v472, %v468
    %v553 = vpack.c.b16 %v473, %v469
    %v554 = vpack.c.b16 %v474, %v470
    %v555 = vpack.c.b16 %v479, %v475
    %v556 = vpack.c.b16 %v480, %v476
    %v557 = vpack.c.b16 %v481, %v477
    %v558 = vpack.c.b16 %v482, %v478
    %v559 = vpack.c.b16 %v487, %v483
    %v560 = vpack.c.b16 %v488, %v484
    %v561 = vpack.c.b16 %v489, %v485
    %v562 = vpack.c.b16 %v490, %v486
    %v563 = vpack.c.b16 %v495, %v491
    %v564 = vpack.c.b16 %v496, %v492
    %v565 = vpack.c.b16 %v497, %v493
    %v566 = vpack.c.b16 %v498, %v494
    %v567 = vpack.c.b16 %v503, %v499
    %v568 = vpack.c.b16 %v504, %v500
    %v569 = vpack.c.b16 %v505, %v501
    %v570 = vpack.c.b16 %v506, %v502
    %v699 = vunpack.c.l.b16 %v251
    %v700 = vunpack.c.h.b16 %v251
    %v701 = vunpack.c.l.b16 %v252
    %v702 = vunpack.c.h.b16 %v252
    %v703 = vunpack.c.l.b16 %v253
    %v704 = vunpack.c.h.b16 %v253
    %v705 = vunpack.c.l.b16 %v254
    %v706 = vunpack.c.h.b16 %v254
    %v707 = vunpack.c.l.b16 %v255
    %v708 = vunpack.c.h.b16 %v255
    %v709 = vunpack.c.l.b16 %v256
    %v710 = vunpack.c.h.b16 %v256
    %v711 = vunpack.c.l.b16 %v257
    %v712 = vunpack.c.h.b16 %v257
    %v713 = vunpack.c.l.b16 %v258
    %v714 = vunpack.c.h.b16 %v258
    %v715 = vunpack.c.l.b16 %v259
    %v716 = vunpack.c.h.b16 %v259
    %v717 = vunpack.c.l.b16 %v260
    %v718 = vunpack.c.h.b16 %v260
    %v719 = vunpack.c.l.b16 %v261
    %v720 = vunpack.c.h.b16 %v261
    %v721 = vunpack.c.l.b16 %v262
    %v722 = vunpack.c.h.b16 %v262
    %v723 = vunpack.c.l.b16 %v263
    %v724 = vunpack.c.h.b16 %v263
    %v725 = vunpack.c.l.b16 %v264
    %v726 = vunpack.c.h.b16 %v264
    %v727 = vunpack.c.l.b16 %v265
    %v728 = vunpack.c.h.b16 %v265
    %v729 = vunpack.c.l.b16 %v266
    %v730 = vunpack.c.h.b16 %v266
    %v731 = vunpack.c.l.b16 %v267
    %v732 = vunpack.c.h.b16 %v267
    %v733 = vunpack.c.l.b16 %v268
    %v734 = vunpack.c.h.b16 %v268
    %v735 = vunpack.c.l.b16 %v269
    %v736 = vunpack.c.h.b16 %v269
    %v737 = vunpack.c.l.b16 %v270
    %v738 = vunpack.c.h.b16 %v270
    %v739 = vunpack.c.l.b16 %v271
    %v740 = vunpack.c.h.b16 %v271
    %v741 = vunpack.c.l.b16 %v272
    %v742 = vunpack.c.h.b16 %v272
    %v743 = vunpack.c.l.b16 %v273
    %v744 = vunpack.c.h.b16 %v273
    %v745 = vunpack.c.l.b16 %v274
    %v746 = vunpack.c.h.b16 %v274
    %v747 = vunpack.c.l.b16 %v275
    %v748 = vunpack.c.h.b16 %v275
    %v749 = vunpack.c.l.b16 %v276
    %v750 = vunpack.c.h.b16 %v276
    %v751 = vunpack.c.l.b16 %v277
    %v752 = vunpack.c.h.b16 %v277
    %v753 = vunpack.c.l.b16 %v278
    %v754 = vunpack.c.h.b16 %v278
    %v755 = vunpack.c.l.b16 %v279
    %v756 = vunpack.c.h.b16 %v279
    %v757 = vunpack.c.l.b16 %v280
    %v758 = vunpack.c.h.b16 %v280
    %v759 = vunpack.c.l.b16 %v281
    %v760 = vunpack.c.h.b16 %v281
    %v761 = vunpack.c.l.b16 %v282
    %v762 = vunpack.c.h.b16 %v282
    %v763 = vunpack.c.l.b16 %v283
    %v764 = vunpack.c.h.b16 %v283
    %v765 = vunpack.c.l.b16 %v284
    %v766 = vunpack.c.h.b16 %v284
    %v767 = vunpack.c.l.b16 %v285
    %v768 = vunpack.c.h.b16 %v285
    %v769 = vunpack.c.l.b16 %v286
    %v770 = vunpack.c.h.b16 %v286
    %v771 = vunpack.c.l.b16 %v287
    %v772 = vunpack.c.h.b16 %v287
    %v773 = vunpack.c.l.b16 %v288
    %v774 = vunpack.c.h.b16 %v288
    %v775 = vunpack.c.l.b16 %v289
    %v776 = vunpack.c.h.b16 %v289
    %v777 = vunpack.c.l.b16 %v290
    %v778 = vunpack.c.h.b16 %v290
    %v779 = vunpack.c.l.b16 %v291
    %v780 = vunpack.c.h.b16 %v291
    %v781 = vunpack.c.l.b16 %v292
    %v782 = vunpack.c.h.b16 %v292
    %v783 = vunpack.c.l.b16 %v293
    %v784 = vunpack.c.h.b16 %v293
    %v785 = vunpack.c.l.b16 %v294
    %v786 = vunpack.c.h.b16 %v294
    %v787 = vunpack.c.l.b16 %v295
    %v788 = vunpack.c.h.b16 %v295
    %v789 = vunpack.c.l.b16 %v296
    %v790 = vunpack.c.h.b16 %v296
    %v791 = vunpack.c.l.b16 %v297
    %v792 = vunpack.c.h.b16 %v297
    %v793 = vunpack.c.l.b16 %v298
    %v794 = vunpack.c.h.b16 %v298
    %v795 = vunpack.c.l.b16 %v299
    %v796 = vunpack.c.h.b16 %v299
    %v797 = vunpack.c.l.b16 %v300
    %v798 = vunpack.c.h.b16 %v300
    %v799 = vunpack.c.l.b16 %v301
    %v800 = vunpack.c.h.b16 %v301
    %v801 = vunpack.c.l.b16 %v302
    %v802 = vunpack.c.h.b16 %v302
    %v803 = vunpack.c.l.b16 %v303
    %v804 = vunpack.c.h.b16 %v303
    %v805 = vunpack.c.l.b16 %v304
    %v806 = vunpack.c.h.b16 %v304
    %v807 = vunpack.c.l.b16 %v305
    %v808 = vunpack.c.h.b16 %v305
    %v809 = vunpack.c.l.b16 %v306
    %v810 = vunpack.c.h.b16 %v306
    %v811 = vunpack.c.l.b16 %v307
    %v812 = vunpack.c.h.b16 %v307
    %v813 = vunpack.c.l.b16 %v308
    %v814 = vunpack.c.h.b16 %v308
    %v815 = vunpack.c.l.b16 %v309
    %v816 = vunpack.c.h.b16 %v309
    %v817 = vunpack.c.l.b16 %v310
    %v818 = vunpack.c.h.b16 %v310
    %v819 = vunpack.c.l.b16 %v311
    %v820 = vunpack.c.h.b16 %v311
    %v821 = vunpack.c.l.b16 %v312
    %v822 = vunpack.c.h.b16 %v312
    %v823 = vunpack.c.l.b16 %v313
    %v824 = vunpack.c.h.b16 %v313
    %v825 = vunpack.c.l.b16 %v314
    %v826 = vunpack.c.h.b16 %v314
    %v827 = vpack.c.b16 %v701, %v699
    %v828 = vpack.c.b16 %v702, %v700
    %v829 = vpack.c.b16 %v705, %v703
    %v830 = vpack.c.b16 %v706, %v704
    %v831 = vpack.c.b16 %v709, %v707
    %v832 = vpack.c.b16 %v710, %v708
    %v833 = vpack.c.b16 %v713, %v711
    %v834 = vpack.c.b16 %v714, %v712
    %v835 = vpack.c.b16 %v717, %v715
    %v836 = vpack.c.b16 %v718, %v716
    %v837 = vpack.c.b16 %v721, %v719
    %v838 = vpack.c.b16 %v722, %v720
    %v839 = vpack.c.b16 %v725, %v723
    %v840 = vpack.c.b16 %v726, %v724
    %v841 = vpack.c.b16 %v729, %v727
    %v842 = vpack.c.b16 %v730, %v728
    %v843 = vpack.c.b16 %v733, %v731
    %v844 = vpack.c.b16 %v734, %v732
    %v845 = vpack.c.b16 %v737, %v735
    %v846 = vpack.c.b16 %v738, %v736
    %v847 = vpack.c.b16 %v741, %v739
    %v848 = vpack.c.b16 %v742, %v740
    %v849 = vpack.c.b16 %v745, %v743
    %v850 = vpack.c.b16 %v746, %v744
    %v851 = vpack.c.b16 %v749, %v747
    %v852 = vpack.c.b16 %v750, %v748
    %v853 = vpack.c.b16 %v753, %v751
    %v854 = vpack.c.b16 %v754, %v752
    %v855 = vpack.c.b16 %v757, %v755
    %v856 = vpack.c.b16 %v758, %v756
    %v857 = vpack.c.b16 %v761, %v759
    %v858 = vpack.c.b16 %v762, %v760
    %v859 = vpack.c.b16 %v765, %v763
    %v860 = vpack.c.b16 %v766, %v764
    %v861 = vpack.c.b16 %v769, %v767
    %v862 = vpack.c.b16 %v770, %v768
    %v863 = vpack.c.b16 %v773, %v771
    %v864 = vpack.c.b16 %v774, %v772
    %v865 = vpack.c.b16 %v777, %v775
    %v866 = vpack.c.b16 %v778, %v776
    %v867 = vpack.c.b16 %v781, %v779
    %v868 = vpack.c.b16 %v782, %v780
    %v869 = vpack.c.b16 %v785, %v783
    %v870 = vpack.c.b16 %v786, %v784
    %v871 = vpack.c.b16 %v789, %v787
    %v872 = vpack.c.b16 %v790, %v788
    %v873 = vpack.c.b16 %v793, %v791
    %v874 = vpack.c.b16 %v794, %v792
    %v875 = vpack.c.b16 %v797, %v795
    %v876 = vpack.c.b16 %v798, %v796
    %v877 = vpack.c.b16 %v801, %v799
    %v878 = vpack.c.b16 %v802, %v800
    %v879 = vpack.c.b16 %v805, %v803
    %v880 = vpack.c.b16 %v806, %v804
    %v881 = vpack.c.b16 %v809, %v807
    %v882 = vpack.c.b16 %v810, %v808
    %v883 = vpack.c.b16 %v813, %v811
    %v884 = vpack.c.b16 %v814, %v812
    %v885 = vpack.c.b16 %v817, %v815
    %v886 = vpack.c.b16 %v818, %v816
    %v887 = vpack.c.b16 %v821, %v819
    %v888 = vpack.c.b16 %v822, %v820
    %v889 = vpack.c.b16 %v825, %v823
    %v890 = vpack.c.b16 %v826, %v824
    %955 = vmatprep.subr.bf16.mxu0 %v828
    %956 = vmatpush1.bf16.msra.mxu0 %v827
    %957 = vmatprep.subr.bf16.mxu0 %v830
    %958 = vmatpush1.bf16.msra.mxu0 %v829
    %959 = vmatprep.subr.bf16.mxu0 %v832
    %960 = vmatpush1.bf16.msra.mxu0 %v831
    %961 = vmatprep.subr.bf16.mxu0 %v834
    %962 = vmatpush1.bf16.msra.mxu0 %v833
    %963 = vmatprep.subr.bf16.mxu0 %v836
    %964 = vmatpush1.bf16.msra.mxu0 %v835
    %965 = vmatprep.subr.bf16.mxu0 %v838
    %966 = vmatpush1.bf16.msra.mxu0 %v837
    %967 = vmatprep.subr.bf16.mxu0 %v840
    %968 = vmatpush1.bf16.msra.mxu0 %v839
    %969 = vmatprep.subr.bf16.mxu0 %v842
    %970 = vmatpush1.bf16.msra.mxu0 %v841
    %971 = vmatprep.subr.bf16.mxu0 %v844
    %972 = vmatpush1.bf16.msra.mxu0 %v843
    %973 = vmatprep.subr.bf16.mxu0 %v846
    %974 = vmatpush1.bf16.msra.mxu0 %v845
    %975 = vmatprep.subr.bf16.mxu0 %v848
    %976 = vmatpush1.bf16.msra.mxu0 %v847
    %977 = vmatprep.subr.bf16.mxu0 %v850
    %978 = vmatpush1.bf16.msra.mxu0 %v849
    %979 = vmatprep.subr.bf16.mxu0 %v852
    %980 = vmatpush1.bf16.msra.mxu0 %v851
    %981 = vmatprep.subr.bf16.mxu0 %v854
    %982 = vmatpush1.bf16.msra.mxu0 %v853
    %983 = vmatprep.subr.bf16.mxu0 %v856
    %984 = vmatpush1.bf16.msra.mxu0 %v855
    %985 = vmatprep.subr.bf16.mxu0 %v858
    %986 = vmatpush1.bf16.msra.mxu0 %v857
    %987 = vmatprep.mubr.bf16.mxu0 %v508
    %988 = vmatmul.mubr.bf16.gmra.mrb[0].mxu0 %v507
    %v989 = vpop.f32.mrb[0].mxu0
    %v990 = vadd.f32 0.0, %v989
    %v991 = vpop.f32.mrb[0].mxu0
    %v992 = vadd.f32 0.0, %v991
    %v993 = vpop.f32.mrb[0].mxu0
    %v994 = vadd.f32 0.0, %v993
    %v995 = vpop.f32.mrb[0].mxu0
    %v996 = vadd.f32 0.0, %v995
    %997 = vmatprep.mubr.bf16.mxu0 %v512
    %998 = vmatmul.mubr.bf16.gmra.mrb[0].mxu0 %v511
    %v999 = vpop.f32.mrb[0].mxu0
    %v1000 = vadd.f32 0.0, %v999
    %v1001 = vpop.f32.mrb[0].mxu0
    %v1002 = vadd.f32 0.0, %v1001
    %v1003 = vpop.f32.mrb[0].mxu0
    %v1004 = vadd.f32 0.0, %v1003
    %v1005 = vpop.f32.mrb[0].mxu0
    %v1006 = vadd.f32 0.0, %v1005
    %1007 = vmatprep.mubr.bf16.mxu0 %v516
    %1008 = vmatmul.mubr.bf16.gmra.mrb[0].mxu0 %v515
    %v1009 = vpop.f32.mrb[0].mxu0
    %v1010 = vadd.f32 0.0, %v1009
    %v1011 = vpop.f32.mrb[0].mxu0
    %v1012 = vadd.f32 0.0, %v1011
    %v1013 = vpop.f32.mrb[0].mxu0
    %v1014 = vadd.f32 0.0, %v1013
    %v1015 = vpop.f32.mrb[0].mxu0
    %v1016 = vadd.f32 0.0, %v1015
    %1017 = vmatprep.mubr.bf16.mxu0 %v520
    %1018 = vmatmul.mubr.bf16.gmra.mrb[0].mxu0 %v519
    %v1019 = vpop.f32.mrb[0].mxu0
    %v1020 = vadd.f32 0.0, %v1019
    %v1021 = vpop.f32.mrb[0].mxu0
    %v1022 = vadd.f32 0.0, %v1021
    %v1023 = vpop.f32.mrb[0].mxu0
    %v1024 = vadd.f32 0.0, %v1023
    %v1025 = vpop.f32.mrb[0].mxu0
    %v1026 = vadd.f32 0.0, %v1025
    %1027 = vmatprep.mubr.bf16.mxu0 %v524
    %1028 = vmatmul.mubr.bf16.gmra.mrb[0].mxu0 %v523
    %v1029 = vpop.f32.mrb[0].mxu0
    %v1030 = vadd.f32 0.0, %v1029
    %v1031 = vpop.f32.mrb[0].mxu0
    %v1032 = vadd.f32 0.0, %v1031
    %v1033 = vpop.f32.mrb[0].mxu0
    %v1034 = vadd.f32 0.0, %v1033
    %v1035 = vpop.f32.mrb[0].mxu0
    %v1036 = vadd.f32 0.0, %v1035
    %1037 = vmatprep.mubr.bf16.mxu0 %v528
    %1038 = vmatmul.mubr.bf16.gmra.mrb[0].mxu0 %v527
    %v1039 = vpop.f32.mrb[0].mxu0
    %v1040 = vadd.f32 0.0, %v1039
    %v1041 = vpop.f32.mrb[0].mxu0
    %v1042 = vadd.f32 0.0, %v1041
    %v1043 = vpop.f32.mrb[0].mxu0
    %v1044 = vadd.f32 0.0, %v1043
    %v1045 = vpop.f32.mrb[0].mxu0
    %v1046 = vadd.f32 0.0, %v1045
    %1047 = vmatprep.mubr.bf16.mxu0 %v532
    %1048 = vmatmul.mubr.bf16.gmra.mrb[0].mxu0 %v531
    %v1049 = vpop.f32.mrb[0].mxu0
    %v1050 = vadd.f32 0.0, %v1049
    %v1051 = vpop.f32.mrb[0].mxu0
    %v1052 = vadd.f32 0.0, %v1051
    %v1053 = vpop.f32.mrb[0].mxu0
    %v1054 = vadd.f32 0.0, %v1053
    %v1055 = vpop.f32.mrb[0].mxu0
    %v1056 = vadd.f32 0.0, %v1055
    %1057 = vmatprep.mubr.bf16.mxu0 %v536
    %1058 = vmatmul.mubr.bf16.gmra.mrb[0].mxu0 %v535
    %v1059 = vpop.f32.mrb[0].mxu0
    %v1060 = vadd.f32 0.0, %v1059
    %v1061 = vpop.f32.mrb[0].mxu0
    %v1062 = vadd.f32 0.0, %v1061
    %v1063 = vpop.f32.mrb[0].mxu0
    %v1064 = vadd.f32 0.0, %v1063
    %v1065 = vpop.f32.mrb[0].mxu0
    %v1066 = vadd.f32 0.0, %v1065
    %1067 = vmatprep.mubr.bf16.mxu0 %v540
    %1068 = vmatmul.mubr.bf16.gmra.mrb[0].mxu0 %v539
    %v1069 = vpop.f32.mrb[0].mxu0
    %v1070 = vadd.f32 0.0, %v1069
    %v1071 = vpop.f32.mrb[0].mxu0
    %v1072 = vadd.f32 0.0, %v1071
    %v1073 = vpop.f32.mrb[0].mxu0
    %v1074 = vadd.f32 0.0, %v1073
    %v1075 = vpop.f32.mrb[0].mxu0
    %v1076 = vadd.f32 0.0, %v1075
    %1077 = vmatprep.mubr.bf16.mxu0 %v544
    %1078 = vmatmul.mubr.bf16.gmra.mrb[0].mxu0 %v543
    %v1079 = vpop.f32.mrb[0].mxu0
    %v1080 = vadd.f32 0.0, %v1079
    %v1081 = vpop.f32.mrb[0].mxu0
    %v1082 = vadd.f32 0.0, %v1081
    %v1083 = vpop.f32.mrb[0].mxu0
    %v1084 = vadd.f32 0.0, %v1083
    %v1085 = vpop.f32.mrb[0].mxu0
    %v1086 = vadd.f32 0.0, %v1085
    %1087 = vmatprep.mubr.bf16.mxu0 %v548
    %1088 = vmatmul.mubr.bf16.gmra.mrb[0].mxu0 %v547
    %v1089 = vpop.f32.mrb[0].mxu0
    %v1090 = vadd.f32 0.0, %v1089
    %v1091 = vpop.f32.mrb[0].mxu0
    %v1092 = vadd.f32 0.0, %v1091
    %v1093 = vpop.f32.mrb[0].mxu0
    %v1094 = vadd.f32 0.0, %v1093
    %v1095 = vpop.f32.mrb[0].mxu0
    %v1096 = vadd.f32 0.0, %v1095
    %1097 = vmatprep.mubr.bf16.mxu0 %v552
    %1098 = vmatmul.mubr.bf16.gmra.mrb[0].mxu0 %v551
    %v1099 = vpop.f32.mrb[0].mxu0
    %v1100 = vadd.f32 0.0, %v1099
    %v1101 = vpop.f32.mrb[0].mxu0
    %v1102 = vadd.f32 0.0, %v1101
    %v1103 = vpop.f32.mrb[0].mxu0
    %v1104 = vadd.f32 0.0, %v1103
    %v1105 = vpop.f32.mrb[0].mxu0
    %v1106 = vadd.f32 0.0, %v1105
    %1107 = vmatprep.mubr.bf16.mxu0 %v556
    %1108 = vmatmul.mubr.bf16.gmra.mrb[0].mxu0 %v555
    %v1109 = vpop.f32.mrb[0].mxu0
    %v1110 = vadd.f32 0.0, %v1109
    %v1111 = vpop.f32.mrb[0].mxu0
    %v1112 = vadd.f32 0.0, %v1111
    %v1113 = vpop.f32.mrb[0].mxu0
    %v1114 = vadd.f32 0.0, %v1113
    %v1115 = vpop.f32.mrb[0].mxu0
    %v1116 = vadd.f32 0.0, %v1115
    %1117 = vmatprep.mubr.bf16.mxu0 %v560
    %1118 = vmatmul.mubr.bf16.gmra.mrb[0].mxu0 %v559
    %v1119 = vpop.f32.mrb[0].mxu0
    %v1120 = vadd.f32 0.0, %v1119
    %v1121 = vpop.f32.mrb[0].mxu0
    %v1122 = vadd.f32 0.0, %v1121
    %v1123 = vpop.f32.mrb[0].mxu0
    %v1124 = vadd.f32 0.0, %v1123
    %v1125 = vpop.f32.mrb[0].mxu0
    %v1126 = vadd.f32 0.0, %v1125
    %1127 = vmatprep.mubr.bf16.mxu0 %v564
    %1128 = vmatmul.mubr.bf16.gmra.mrb[0].mxu0 %v563
    %v1129 = vpop.f32.mrb[0].mxu0
    %v1130 = vadd.f32 0.0, %v1129
    %v1131 = vpop.f32.mrb[0].mxu0
    %v1132 = vadd.f32 0.0, %v1131
    %v1133 = vpop.f32.mrb[0].mxu0
    %v1134 = vadd.f32 0.0, %v1133
    %v1135 = vpop.f32.mrb[0].mxu0
    %v1136 = vadd.f32 0.0, %v1135
    %1137 = vmatprep.mubr.bf16.mxu0 %v568
    %1138 = vmatmul.mubr.bf16.gmra.mrb[0].mxu0 %v567
    %v1139 = vpop.f32.mrb[0].mxu0
    %v1140 = vadd.f32 0.0, %v1139
    %v1141 = vpop.f32.mrb[0].mxu0
    %v1142 = vadd.f32 0.0, %v1141
    %v1143 = vpop.f32.mrb[0].mxu0
    %v1144 = vadd.f32 0.0, %v1143
    %v1145 = vpop.f32.mrb[0].mxu0
    %v1146 = vadd.f32 0.0, %v1145
    %1147 = vdwg.mxu0
    %1148 = vmatprep.subr.bf16.mxu0 %v860
    %1149 = vmatpush1.bf16.msra.mxu0 %v859
    %1150 = vmatprep.subr.bf16.mxu0 %v862
    %1151 = vmatpush1.bf16.msra.mxu0 %v861
    %1152 = vmatprep.subr.bf16.mxu0 %v864
    %1153 = vmatpush1.bf16.msra.mxu0 %v863
    %1154 = vmatprep.subr.bf16.mxu0 %v866
    %1155 = vmatpush1.bf16.msra.mxu0 %v865
    %1156 = vmatprep.subr.bf16.mxu0 %v868
    %1157 = vmatpush1.bf16.msra.mxu0 %v867
    %1158 = vmatprep.subr.bf16.mxu0 %v870
    %1159 = vmatpush1.bf16.msra.mxu0 %v869
    %1160 = vmatprep.subr.bf16.mxu0 %v872
    %1161 = vmatpush1.bf16.msra.mxu0 %v871
    %1162 = vmatprep.subr.bf16.mxu0 %v874
    %1163 = vmatpush1.bf16.msra.mxu0 %v873
    %1164 = vmatprep.subr.bf16.mxu0 %v876
    %1165 = vmatpush1.bf16.msra.mxu0 %v875
    %1166 = vmatprep.subr.bf16.mxu0 %v878
    %1167 = vmatpush1.bf16.msra.mxu0 %v877
    %1168 = vmatprep.subr.bf16.mxu0 %v880
    %1169 = vmatpush1.bf16.msra.mxu0 %v879
    %1170 = vmatprep.subr.bf16.mxu0 %v882
    %1171 = vmatpush1.bf16.msra.mxu0 %v881
    %1172 = vmatprep.subr.bf16.mxu0 %v884
    %1173 = vmatpush1.bf16.msra.mxu0 %v883
    %1174 = vmatprep.subr.bf16.mxu0 %v886
    %1175 = vmatpush1.bf16.msra.mxu0 %v885
    %1176 = vmatprep.subr.bf16.mxu0 %v888
    %1177 = vmatpush1.bf16.msra.mxu0 %v887
    %1178 = vmatprep.subr.bf16.mxu0 %v890
    %1179 = vmatpush1.bf16.msra.mxu0 %v889
    %1180 = vmatprep.mubr.bf16.mxu0 %v510
    %1181 = vmatmul.mubr.bf16.gmra.mrb[0].mxu0 %v509
    %v1182 = vpop.f32.mrb[0].mxu0
    %v1183 = vadd.f32 %v990, %v1182
    %v1184 = vpop.f32.mrb[0].mxu0
    %v1185 = vadd.f32 %v992, %v1184
    %v1186 = vpop.f32.mrb[0].mxu0
    %v1187 = vadd.f32 %v994, %v1186
    %v1188 = vpop.f32.mrb[0].mxu0
    %v1189 = vadd.f32 %v996, %v1188
    %1190 = vmatprep.mubr.bf16.mxu0 %v514
    %1191 = vmatmul.mubr.bf16.gmra.mrb[0].mxu0 %v513
    %v1192 = vpop.f32.mrb[0].mxu0
    %v1193 = vadd.f32 %v1000, %v1192
    %v1194 = vpop.f32.mrb[0].mxu0
    %v1195 = vadd.f32 %v1002, %v1194
    %v1196 = vpop.f32.mrb[0].mxu0
    %v1197 = vadd.f32 %v1004, %v1196
    %v1198 = vpop.f32.mrb[0].mxu0
    %v1199 = vadd.f32 %v1006, %v1198
    %1200 = vmatprep.mubr.bf16.mxu0 %v518
    %1201 = vmatmul.mubr.bf16.gmra.mrb[0].mxu0 %v517
    %v1202 = vpop.f32.mrb[0].mxu0
    %v1203 = vadd.f32 %v1010, %v1202
    %v1204 = vpop.f32.mrb[0].mxu0
    %v1205 = vadd.f32 %v1012, %v1204
    %v1206 = vpop.f32.mrb[0].mxu0
    %v1207 = vadd.f32 %v1014, %v1206
    %v1208 = vpop.f32.mrb[0].mxu0
    %v1209 = vadd.f32 %v1016, %v1208
    %1210 = vmatprep.mubr.bf16.mxu0 %v522
    %1211 = vmatmul.mubr.bf16.gmra.mrb[0].mxu0 %v521
    %v1212 = vpop.f32.mrb[0].mxu0
    %v1213 = vadd.f32 %v1020, %v1212
    %v1214 = vpop.f32.mrb[0].mxu0
    %v1215 = vadd.f32 %v1022, %v1214
    %v1216 = vpop.f32.mrb[0].mxu0
    %v1217 = vadd.f32 %v1024, %v1216
    %v1218 = vpop.f32.mrb[0].mxu0
    %v1219 = vadd.f32 %v1026, %v1218
    %1220 = vmatprep.mubr.bf16.mxu0 %v526
    %1221 = vmatmul.mubr.bf16.gmra.mrb[0].mxu0 %v525
    %v1222 = vpop.f32.mrb[0].mxu0
    %v1223 = vadd.f32 %v1030, %v1222
    %v1224 = vpop.f32.mrb[0].mxu0
    %v1225 = vadd.f32 %v1032, %v1224
    %v1226 = vpop.f32.mrb[0].mxu0
    %v1227 = vadd.f32 %v1034, %v1226
    %v1228 = vpop.f32.mrb[0].mxu0
    %v1229 = vadd.f32 %v1036, %v1228
    %1230 = vmatprep.mubr.bf16.mxu0 %v530
    %1231 = vmatmul.mubr.bf16.gmra.mrb[0].mxu0 %v529
    %v1232 = vpop.f32.mrb[0].mxu0
    %v1233 = vadd.f32 %v1040, %v1232
    %v1234 = vpop.f32.mrb[0].mxu0
    %v1235 = vadd.f32 %v1042, %v1234
    %v1236 = vpop.f32.mrb[0].mxu0
    %v1237 = vadd.f32 %v1044, %v1236
    %v1238 = vpop.f32.mrb[0].mxu0
    %v1239 = vadd.f32 %v1046, %v1238
    %1240 = vmatprep.mubr.bf16.mxu0 %v534
    %1241 = vmatmul.mubr.bf16.gmra.mrb[0].mxu0 %v533
    %v1242 = vpop.f32.mrb[0].mxu0
    %v1243 = vadd.f32 %v1050, %v1242
    %v1244 = vpop.f32.mrb[0].mxu0
    %v1245 = vadd.f32 %v1052, %v1244
    %v1246 = vpop.f32.mrb[0].mxu0
    %v1247 = vadd.f32 %v1054, %v1246
    %v1248 = vpop.f32.mrb[0].mxu0
    %v1249 = vadd.f32 %v1056, %v1248
    %1250 = vmatprep.mubr.bf16.mxu0 %v538
    %1251 = vmatmul.mubr.bf16.gmra.mrb[0].mxu0 %v537
    %v1252 = vpop.f32.mrb[0].mxu0
    %v1253 = vadd.f32 %v1060, %v1252
    %v1254 = vpop.f32.mrb[0].mxu0
    %v1255 = vadd.f32 %v1062, %v1254
    %v1256 = vpop.f32.mrb[0].mxu0
    %v1257 = vadd.f32 %v1064, %v1256
    %v1258 = vpop.f32.mrb[0].mxu0
    %v1259 = vadd.f32 %v1066, %v1258
    %1260 = vmatprep.mubr.bf16.mxu0 %v542
    %1261 = vmatmul.mubr.bf16.gmra.mrb[0].mxu0 %v541
    %v1262 = vpop.f32.mrb[0].mxu0
    %v1263 = vadd.f32 %v1070, %v1262
    %v1264 = vpop.f32.mrb[0].mxu0
    %v1265 = vadd.f32 %v1072, %v1264
    %v1266 = vpop.f32.mrb[0].mxu0
    %v1267 = vadd.f32 %v1074, %v1266
    %v1268 = vpop.f32.mrb[0].mxu0
    %v1269 = vadd.f32 %v1076, %v1268
    %1270 = vmatprep.mubr.bf16.mxu0 %v546
    %1271 = vmatmul.mubr.bf16.gmra.mrb[0].mxu0 %v545
    %v1272 = vpop.f32.mrb[0].mxu0
    %v1273 = vadd.f32 %v1080, %v1272
    %v1274 = vpop.f32.mrb[0].mxu0
    %v1275 = vadd.f32 %v1082, %v1274
    %v1276 = vpop.f32.mrb[0].mxu0
    %v1277 = vadd.f32 %v1084, %v1276
    %v1278 = vpop.f32.mrb[0].mxu0
    %v1279 = vadd.f32 %v1086, %v1278
    %1280 = vmatprep.mubr.bf16.mxu0 %v550
    %1281 = vmatmul.mubr.bf16.gmra.mrb[0].mxu0 %v549
    %v1282 = vpop.f32.mrb[0].mxu0
    %v1283 = vadd.f32 %v1090, %v1282
    %v1284 = vpop.f32.mrb[0].mxu0
    %v1285 = vadd.f32 %v1092, %v1284
    %v1286 = vpop.f32.mrb[0].mxu0
    %v1287 = vadd.f32 %v1094, %v1286
    %v1288 = vpop.f32.mrb[0].mxu0
    %v1289 = vadd.f32 %v1096, %v1288
    %1290 = vmatprep.mubr.bf16.mxu0 %v554
    %1291 = vmatmul.mubr.bf16.gmra.mrb[0].mxu0 %v553
    %v1292 = vpop.f32.mrb[0].mxu0
    %v1293 = vadd.f32 %v1100, %v1292
    %v1294 = vpop.f32.mrb[0].mxu0
    %v1295 = vadd.f32 %v1102, %v1294
    %v1296 = vpop.f32.mrb[0].mxu0
    %v1297 = vadd.f32 %v1104, %v1296
    %v1298 = vpop.f32.mrb[0].mxu0
    %v1299 = vadd.f32 %v1106, %v1298
    %1300 = vmatprep.mubr.bf16.mxu0 %v558
    %1301 = vmatmul.mubr.bf16.gmra.mrb[0].mxu0 %v557
    %v1302 = vpop.f32.mrb[0].mxu0
    %v1303 = vadd.f32 %v1110, %v1302
    %v1304 = vpop.f32.mrb[0].mxu0
    %v1305 = vadd.f32 %v1112, %v1304
    %v1306 = vpop.f32.mrb[0].mxu0
    %v1307 = vadd.f32 %v1114, %v1306
    %v1308 = vpop.f32.mrb[0].mxu0
    %v1309 = vadd.f32 %v1116, %v1308
    %1310 = vmatprep.mubr.bf16.mxu0 %v562
    %1311 = vmatmul.mubr.bf16.gmra.mrb[0].mxu0 %v561
    %v1312 = vpop.f32.mrb[0].mxu0
    %v1313 = vadd.f32 %v1120, %v1312
    %v1314 = vpop.f32.mrb[0].mxu0
    %v1315 = vadd.f32 %v1122, %v1314
    %v1316 = vpop.f32.mrb[0].mxu0
    %v1317 = vadd.f32 %v1124, %v1316
    %v1318 = vpop.f32.mrb[0].mxu0
    %v1319 = vadd.f32 %v1126, %v1318
    %1320 = vmatprep.mubr.bf16.mxu0 %v566
    %1321 = vmatmul.mubr.bf16.gmra.mrb[0].mxu0 %v565
    %v1322 = vpop.f32.mrb[0].mxu0
    %v1323 = vadd.f32 %v1130, %v1322
    %v1324 = vpop.f32.mrb[0].mxu0
    %v1325 = vadd.f32 %v1132, %v1324
    %v1326 = vpop.f32.mrb[0].mxu0
    %v1327 = vadd.f32 %v1134, %v1326
    %v1328 = vpop.f32.mrb[0].mxu0
    %v1329 = vadd.f32 %v1136, %v1328
    %1330 = vmatprep.mubr.bf16.mxu0 %v570
    %1331 = vmatmul.mubr.bf16.gmra.mrb[0].mxu0 %v569
    %v1332 = vpop.f32.mrb[0].mxu0
    %v1333 = vadd.f32 %v1140, %v1332
    %v1334 = vpop.f32.mrb[0].mxu0
    %v1335 = vadd.f32 %v1142, %v1334
    %v1336 = vpop.f32.mrb[0].mxu0
    %v1337 = vadd.f32 %v1144, %v1336
    %v1338 = vpop.f32.mrb[0].mxu0
    %v1339 = vadd.f32 %v1146, %v1338
    %1340 = vdwg.mxu0
    %v1341 = vadd.f32 %v123, %v1183
    %v1342 = vadd.f32 %v124, %v1185
    %v1343 = vadd.f32 %v125, %v1187
    %v1344 = vadd.f32 %v126, %v1189
    %v1345 = vadd.f32 %v127, %v1193
    %v1346 = vadd.f32 %v128, %v1195
    %v1347 = vadd.f32 %v129, %v1197
    %v1348 = vadd.f32 %v130, %v1199
    %v1349 = vadd.f32 %v131, %v1203
    %v1350 = vadd.f32 %v132, %v1205
    %v1351 = vadd.f32 %v133, %v1207
    %v1352 = vadd.f32 %v134, %v1209
    %v1353 = vadd.f32 %v135, %v1213
    %v1354 = vadd.f32 %v136, %v1215
    %v1355 = vadd.f32 %v137, %v1217
    %v1356 = vadd.f32 %v138, %v1219
    %v1357 = vadd.f32 %v139, %v1223
    %v1358 = vadd.f32 %v140, %v1225
    %v1359 = vadd.f32 %v141, %v1227
    %v1360 = vadd.f32 %v142, %v1229
    %v1361 = vadd.f32 %v143, %v1233
    %v1362 = vadd.f32 %v144, %v1235
    %v1363 = vadd.f32 %v145, %v1237
    %v1364 = vadd.f32 %v146, %v1239
    %v1365 = vadd.f32 %v147, %v1243
    %v1366 = vadd.f32 %v148, %v1245
    %v1367 = vadd.f32 %v149, %v1247
    %v1368 = vadd.f32 %v150, %v1249
    %v1369 = vadd.f32 %v151, %v1253
    %v1370 = vadd.f32 %v152, %v1255
    %v1371 = vadd.f32 %v153, %v1257
    %v1372 = vadd.f32 %v154, %v1259
    %v1373 = vadd.f32 %v155, %v1263
    %v1374 = vadd.f32 %v156, %v1265
    %v1375 = vadd.f32 %v157, %v1267
    %v1376 = vadd.f32 %v158, %v1269
    %v1377 = vadd.f32 %v159, %v1273
    %v1378 = vadd.f32 %v160, %v1275
    %v1379 = vadd.f32 %v161, %v1277
    %v1380 = vadd.f32 %v162, %v1279
    %v1381 = vadd.f32 %v163, %v1283
    %v1382 = vadd.f32 %v164, %v1285
    %v1383 = vadd.f32 %v165, %v1287
    %v1384 = vadd.f32 %v166, %v1289
    %v1385 = vadd.f32 %v167, %v1293
    %v1386 = vadd.f32 %v168, %v1295
    %v1387 = vadd.f32 %v169, %v1297
    %v1388 = vadd.f32 %v170, %v1299
    %v1389 = vadd.f32 %v171, %v1303
    %v1390 = vadd.f32 %v172, %v1305
    %v1391 = vadd.f32 %v173, %v1307
    %v1392 = vadd.f32 %v174, %v1309
    %v1393 = vadd.f32 %v175, %v1313
    %v1394 = vadd.f32 %v176, %v1315
    %v1395 = vadd.f32 %v177, %v1317
    %v1396 = vadd.f32 %v178, %v1319
    %v1397 = vadd.f32 %v179, %v1323
    %v1398 = vadd.f32 %v180, %v1325
    %v1399 = vadd.f32 %v181, %v1327
    %v1400 = vadd.f32 %v182, %v1329
    %v1401 = vadd.f32 %v183, %v1333
    %v1402 = vadd.f32 %v184, %v1335
    %v1403 = vadd.f32 %v185, %v1337
    %v1404 = vadd.f32 %v186, %v1339
    %1405 = vst [vmem:[#allocation7] sm:$0xff] %v1341
    %1406 = vst [vmem:[#allocation7 + $0x8] sm:$0xff] %v1342
    %1407 = vst [vmem:[#allocation7 + $0x10] sm:$0xff] %v1343
    %1408 = vst [vmem:[#allocation7 + $0x18] sm:$0xff] %v1344
    %1409 = vst [vmem:[#allocation7 + $0x20] sm:$0xff] %v1345
    %1410 = vst [vmem:[#allocation7 + $0x28] sm:$0xff] %v1346
    %1411 = vst [vmem:[#allocation7 + $0x30] sm:$0xff] %v1347
    %1412 = vst [vmem:[#allocation7 + $0x38] sm:$0xff] %v1348
    %1413 = vst [vmem:[#allocation7 + $0x40] sm:$0xff] %v1349
    %1414 = vst [vmem:[#allocation7 + $0x48] sm:$0xff] %v1350
    %1415 = vst [vmem:[#allocation7 + $0x50] sm:$0xff] %v1351
    %1416 = vst [vmem:[#allocation7 + $0x58] sm:$0xff] %v1352
    %1417 = vst [vmem:[#allocation7 + $0x60] sm:$0xff] %v1353
    %1418 = vst [vmem:[#allocation7 + $0x68] sm:$0xff] %v1354
    %1419 = vst [vmem:[#allocation7 + $0x70] sm:$0xff] %v1355
    %1420 = vst [vmem:[#allocation7 + $0x78] sm:$0xff] %v1356
    %1421 = vst [vmem:[#allocation7 + $0x80] sm:$0xff] %v1357
    %1422 = vst [vmem:[#allocation7 + $0x88] sm:$0xff] %v1358
    %1423 = vst [vmem:[#allocation7 + $0x90] sm:$0xff] %v1359
    %1424 = vst [vmem:[#allocation7 + $0x98] sm:$0xff] %v1360
    %1425 = vst [vmem:[#allocation7 + $0xa0] sm:$0xff] %v1361
    %1426 = vst [vmem:[#allocation7 + $0xa8] sm:$0xff] %v1362
    %1427 = vst [vmem:[#allocation7 + $0xb0] sm:$0xff] %v1363
    %1428 = vst [vmem:[#allocation7 + $0xb8] sm:$0xff] %v1364
    %1429 = vst [vmem:[#allocation7 + $0xc0] sm:$0xff] %v1365
    %1430 = vst [vmem:[#allocation7 + $0xc8] sm:$0xff] %v1366
    %1431 = vst [vmem:[#allocation7 + $0xd0] sm:$0xff] %v1367
    %1432 = vst [vmem:[#allocation7 + $0xd8] sm:$0xff] %v1368
    %1433 = vst [vmem:[#allocation7 + $0xe0] sm:$0xff] %v1369
    %1434 = vst [vmem:[#allocation7 + $0xe8] sm:$0xff] %v1370
    %1435 = vst [vmem:[#allocation7 + $0xf0] sm:$0xff] %v1371
    %1436 = vst [vmem:[#allocation7 + $0xf8] sm:$0xff] %v1372
    %1437 = vst [vmem:[#allocation7 + $0x100] sm:$0xff] %v1373
    %1438 = vst [vmem:[#allocation7 + $0x108] sm:$0xff] %v1374
    %1439 = vst [vmem:[#allocation7 + $0x110] sm:$0xff] %v1375
    %1440 = vst [vmem:[#allocation7 + $0x118] sm:$0xff] %v1376
    %1441 = vst [vmem:[#allocation7 + $0x120] sm:$0xff] %v1377
    %1442 = vst [vmem:[#allocation7 + $0x128] sm:$0xff] %v1378
    %1443 = vst [vmem:[#allocation7 + $0x130] sm:$0xff] %v1379
    %1444 = vst [vmem:[#allocation7 + $0x138] sm:$0xff] %v1380
    %1445 = vst [vmem:[#allocation7 + $0x140] sm:$0xff] %v1381
    %1446 = vst [vmem:[#allocation7 + $0x148] sm:$0xff] %v1382
    %1447 = vst [vmem:[#allocation7 + $0x150] sm:$0xff] %v1383
    %1448 = vst [vmem:[#allocation7 + $0x158] sm:$0xff] %v1384
    %1449 = vst [vmem:[#allocation7 + $0x160] sm:$0xff] %v1385
    %1450 = vst [vmem:[#allocation7 + $0x168] sm:$0xff] %v1386
    %1451 = vst [vmem:[#allocation7 + $0x170] sm:$0xff] %v1387
    %1452 = vst [vmem:[#allocation7 + $0x178] sm:$0xff] %v1388
    %1453 = vst [vmem:[#allocation7 + $0x180] sm:$0xff] %v1389
    %1454 = vst [vmem:[#allocation7 + $0x188] sm:$0xff] %v1390
    %1455 = vst [vmem:[#allocation7 + $0x190] sm:$0xff] %v1391
    %1456 = vst [vmem:[#allocation7 + $0x198] sm:$0xff] %v1392
    %1457 = vst [vmem:[#allocation7 + $0x1a0] sm:$0xff] %v1393
    %1458 = vst [vmem:[#allocation7 + $0x1a8] sm:$0xff] %v1394
    %1459 = vst [vmem:[#allocation7 + $0x1b0] sm:$0xff] %v1395
    %1460 = vst [vmem:[#allocation7 + $0x1b8] sm:$0xff] %v1396
    %1461 = vst [vmem:[#allocation7 + $0x1c0] sm:$0xff] %v1397
    %1462 = vst [vmem:[#allocation7 + $0x1c8] sm:$0xff] %v1398
    %1463 = vst [vmem:[#allocation7 + $0x1d0] sm:$0xff] %v1399
    %1464 = vst [vmem:[#allocation7 + $0x1d8] sm:$0xff] %v1400
    %1465 = vst [vmem:[#allocation7 + $0x1e0] sm:$0xff] %v1401
    %1466 = vst [vmem:[#allocation7 + $0x1e8] sm:$0xff] %v1402
    %1467 = vst [vmem:[#allocation7 + $0x1f0] sm:$0xff] %v1403
    %1468 = vst [vmem:[#allocation7 + $0x1f8] sm:$0xff] %v1404
    // Predicated region
    $region26: #{tpu_custom_call.1} parent=1 // pred_check
      _
    $region27: #{tpu_custom_call.1} parent=1 // pred_check_branch
      %1470 = sbr.rel (0) target = $region29
    $region28: #{tpu_custom_call.1} parent=1 // pred_region
      %s1472 = ssub.s32 8192, 8192
      %1473 = vsyncadd [#allocation4], %s1472
      %s1474 = sshll.u32 [#allocation7], 4
      %s1475 = int_to_ptr.vmem [resolvable:$true] %s1474
      %1480 = dma.vmem_to_hbm [thread:$0]  %s1475, 8192, %s3, [#allocation4], 256, 256, 16
    $region29: #{tpu_custom_call.1} parent=1 // pred_fallthru
      _
    // Predicated region
    $region30: #{tpu_custom_call.1} parent=1 // pred_check
      _
    $region31: #{tpu_custom_call.1} parent=1 // pred_check_branch
      %1482 = sbr.rel (0) target = $region33
    $region32: #{tpu_custom_call.1} parent=1 // pred_region
      %1483 = dma.done [#allocation4], 8192
    $region33: #{tpu_custom_call.1} parent=1 // pred_fallthru
      _
    %1484 = vsyncpa [#allocation3], 1
    %1485 = vsyncpa [#allocation6], 1
    %1486 = vsyncpa [#allocation4], 1

</llo_original>
